<compile_context>
chip_gen: v7x
topology: tpu7x:2x2x1
jax: 0.10.0
libtpu: 0.0.40
codegen_flags: <defaults>
</compile_context>

<pallas_src>
import functools

import jax
import jax.numpy as jnp
import numpy as np
from jax.experimental import pallas as pl
from jax.experimental.pallas import tpu as pltpu


def _shift_gcn_kernel(x_ref, m_ref, w_ref, s_ref, b_ref, o_ref):
    """Fused mask-mul + matmul + (BN scale/bias) on one row block.

    x_ref : (row_blk, C_in)            shifted-in activations (rows = flat n,t,v)
    m_ref : (base, C_in)     f32       tanh(Feature_Mask)+1, V-periodic (base=8*V)
    w_ref : (C_in, C_out_pad)          Linear_weight (lane-padded)
    s_ref : (base, C_out_pad) f32      pre-shifted BN scale
    b_ref : (base, C_out_pad) f32      pre-shifted BN bias + folded Linear_bias
    o_ref : (row_blk, C_out_pad)
    """
    base, c_in = m_ref.shape
    row_blk = x_ref.shape[0]
    reps = row_blk // base                     # static
    c_out = o_ref.shape[-1]

    # Mask multiply in f32 (works on v5e's f32-only VPU); reshape splits the
    # row axis by base=200 (multiple of 8 sublanes) -> layout preserving.
    x = x_ref[...].astype(jnp.float32).reshape(reps, base, c_in)
    xm = (x * m_ref[...]).reshape(row_blk, c_in).astype(w_ref.dtype)

    # Single C_in-deep contraction on the MXU, f32 accumulation.
    y = jnp.dot(xm, w_ref[...], preferred_element_type=jnp.float32)

    # BatchNorm scale/bias (+ folded Linear_bias), V-periodic along rows.
    y = y.reshape(reps, base, c_out) * s_ref[...] + b_ref[...]
    o_ref[...] = y.reshape(row_blk, c_out).astype(o_ref.dtype)


def shift_gcn_forward(x0, linear_w, linear_b, feature_mask,
                      bn_gamma, bn_beta, bn_mean, bn_var,
                      *, eps=1e-5, down_params=None,
                      compute_dtype=jnp.bfloat16):
    """Pallas implementation of Shift_gcn.forward (inference BN semantics)."""
    N, C_in, T, V = x0.shape
    C_out = linear_w.shape[1]
    f32 = jnp.float32
    C_out_pad = ((C_out + 127) // 128) * 128     # lane-dense output stores

    # ---- tiny parameter prep (all O(V*C), done once in XLA) ----------------
    mask_vc = jnp.tanh(feature_mask.reshape(V, C_in).astype(f32)) + 1.0

    g = bn_gamma.reshape(V, C_out).astype(f32)
    bet = bn_beta.reshape(V, C_out).astype(f32)
    mu = bn_mean.reshape(V, C_out).astype(f32)
    var = bn_var.reshape(V, C_out).astype(f32)
    s_vd = g * jax.lax.rsqrt(var + eps)          # BN scale in post-shift coords
    b_vd = bet - mu * s_vd                       # BN bias  in post-shift coords

    # Absorb shift_out into the affine: evaluate at pre-shift coordinates
    #   s_pre[u, d] = s[(u + d) % V, d]
    u_ids = jnp.arange(V)[:, None]
    d_ids = jnp.arange(C_out)[None, :]
    pre_idx = (u_ids + d_ids) % V                               # (V, C_out)
    s_pre = jnp.take_along_axis(s_vd, pre_idx, axis=0)
    b_pre = jnp.take_along_axis(b_vd, pre_idx, axis=0)
    # Linear_bias is added before shift_out / BN -> folds into the bias term.
    bias_pre = s_pre * linear_b.reshape(1, C_out).astype(f32) + b_pre

    # Lane-pad the output dimension (zeros; padded columns sliced off later).
    w_mat = linear_w.astype(f32)
    if C_out_pad != C_out:
        pad = C_out_pad - C_out
        w_mat = jnp.pad(w_mat, ((0, 0), (0, pad)))
        s_pre = jnp.pad(s_pre, ((0, 0), (0, pad)))
        bias_pre = jnp.pad(bias_pre, ((0, 0), (0, pad)))
    w_in = w_mat.astype(compute_dtype)

    # ---- shift_in gather + channel-last re-layout (XLA glue, bf16) ---------
    c_ids = jnp.arange(C_in)[None, :]
    v_ids = jnp.arange(V)[:, None]
    shift_in_flat = (((v_ids + c_ids) % V) * C_in + c_ids).reshape(-1)
    x_nt = jnp.transpose(x0.astype(compute_dtype),
                         (0, 2, 3, 1)).reshape(N * T, V * C_in)
    x_rows = x_nt[:, shift_in_flat].reshape(N * T * V, C_in)

    # ---- row blocking: VMEM-budgeted multiple of base = 8*V ----------------
    R = N * T * V
    base = 8 * V                                  # 200: multiple of V and of 8
    n_base = -(-R // base)
    itemsize = jnp.dtype(compute_dtype).itemsize
    # Double-buffered x + out blocks must fit a conservative ~20 MiB budget
    # (safe within the 32 MiB scoped VMEM limit set below, incl. v7x).
    per_base_bytes = 2 * base * (C_in + C_out_pad) * itemsize
    mult_vmem = max(1, (20 * 1024 * 1024) // per_base_bytes)
    mult_cap = max(1, 2048 // base)               # target ~512-2048-row blocks
    mult = int(min(mult_vmem, mult_cap, n_base))
    if n_base >= 2:                               # keep >= 2 blocks (megacore)
        mult = min(mult, max(1, n_base // 2))
    row_blk = mult * base
    num_blocks = -(-n_base // mult)
    R_pad = num_blocks * row_blk
    if R_pad != R:
        # Padded tail rows produce garbage (bias only) and are sliced off
        # below via w_rows[:R] -- keep that slice if this blocking changes.
        x_rows = jnp.pad(x_rows, ((0, R_pad - R), (0, 0)))

    # V-periodic residents at their natural (8*V)-row size (f32, tiny).
    mask_blk = jnp.tile(mask_vc, (8, 1))          # (base, C_in)
    s_blk = jnp.tile(s_pre, (8, 1))               # (base, C_out_pad)
    bias_blk = jnp.tile(bias_pre, (8, 1))         # (base, C_out_pad)

    flops = 2 * R_pad * C_in * C_out_pad
    bytes_accessed = (R_pad * C_in * itemsize            # x stream
                      + R_pad * C_out_pad * itemsize     # output stream
                      + C_in * C_out_pad * itemsize      # weight
                      + base * (C_in + 2 * C_out_pad) * 4)

    w_rows = pl.pallas_call(
        _shift_gcn_kernel,
        out_shape=jax.ShapeDtypeStruct((R_pad, C_out_pad), compute_dtype),
        grid=(num_blocks,),
        in_specs=[
            pl.BlockSpec((row_blk, C_in), lambda i: (i, 0)),
            pl.BlockSpec((base, C_in), lambda i: (0, 0)),        # resident
            pl.BlockSpec((C_in, C_out_pad), lambda i: (0, 0)),   # resident
            pl.BlockSpec((base, C_out_pad), lambda i: (0, 0)),   # resident
            pl.BlockSpec((base, C_out_pad), lambda i: (0, 0)),   # resident
        ],
        out_specs=pl.BlockSpec((row_blk, C_out_pad), lambda i: (i, 0)),
        compiler_params=pltpu.CompilerParams(
            dimension_semantics=("parallel",),
            vmem_limit_bytes=32 * 1024 * 1024),
        cost_estimate=pl.CostEstimate(flops=flops, transcendentals=0,
                                      bytes_accessed=bytes_accessed),
    )(x_rows, mask_blk, w_in, s_blk, bias_blk)

    # ---- shift_out gather, NCHW re-layout, residual, ReLU (XLA glue) --------
    shift_out_flat = (((u_ids - d_ids) % V) * C_out + d_ids).reshape(-1)
    w_nt = w_rows[:R, :C_out].reshape(N * T, V * C_out)
    z = w_nt[:, shift_out_flat].reshape(N, T, V, C_out).astype(f32)
    z = jnp.transpose(z, (0, 3, 1, 2))                   # (N, C_out, T, V)

    if down_params is None:                              # in_channels == out_channels
        res = x0.astype(f32)
    else:                                                # 1x1 Conv2d + BN (inference)
        dw, db, dg, dbe, dmu, dvar = down_params
        y = jnp.einsum('nctv,oc->notv', x0.astype(f32),
                       dw.reshape(C_out, C_in).astype(f32))
        y = y + db.astype(f32)[None, :, None, None]
        sd = dg.astype(f32) * jax.lax.rsqrt(dvar.astype(f32) + eps)
        res = (sd[None, :, None, None]
               * (y - dmu.astype(f32)[None, :, None, None])
               + dbe.astype(f32)[None, :, None, None])

    return jnp.maximum(z + res, 0.0).astype(x0.dtype)


def _reference(x0, linear_w, linear_b, feature_mask,
               bn_gamma, bn_beta, bn_mean, bn_var, *, eps=1e-5):
    """Pure-JAX mirror of the PyTorch module (inference BN), using the
    module's literal index_array construction."""
    N, C, T, V = x0.shape
    C_out = linear_w.shape[1]
    idx_in = np.empty(V * C, dtype=np.int32)
    for i in range(V):
        for j in range(C):
            idx_in[i * C + j] = (i * C + j + j * C) % (C * V)
    idx_out = np.empty(V * C_out, dtype=np.int32)
    for i in range(V):
        for j in range(C_out):
            idx_out[i * C_out + j] = (i * C_out + j - j * C_out) % (C_out * V)

    x = jnp.transpose(x0, (0, 2, 3, 1)).reshape(N * T, V * C)
    x = x[:, idx_in].reshape(N * T, V, C)
    x = x * (jnp.tanh(feature_mask) + 1.0)
    x = jnp.einsum('nwc,cd->nwd', x, linear_w) + linear_b
    x = x.reshape(N * T, V * C_out)[:, idx_out]
    x = bn_gamma * (x - bn_mean) / jnp.sqrt(bn_var + eps) + bn_beta
    x = x.reshape(N, T, V, C_out).transpose(0, 3, 1, 2)
    return jnp.maximum(x + x0, 0.0)


if __name__ == "__main__":
    # V = 25 is hard-wired in the module (Feature_Mask / shift index arrays).
    N, C_in, C_out, T, V = 2, 8, 8, 16, 25
    key = jax.random.PRNGKey(0)
    k = jax.random.split(key, 8)

    x0 = jax.random.normal(k[0], (N, C_in, T, V), jnp.float32)
    linear_w = jax.random.normal(k[1], (C_in, C_out), jnp.float32) \
        * np.sqrt(1.0 / C_out)
    linear_b = 0.1 * jax.random.normal(k[2], (1, 1, C_out), jnp.float32)
    feature_mask = 0.5 * jax.random.normal(k[3], (1, V, C_in), jnp.float32)
    bn_gamma = 1.0 + 0.1 * jax.random.normal(k[4], (V * C_out,), jnp.float32)
    bn_beta = 0.1 * jax.random.normal(k[5], (V * C_out,), jnp.float32)
    bn_mean = 0.1 * jax.random.normal(k[6], (V * C_out,), jnp.float32)
    bn_var = jax.random.uniform(k[7], (V * C_out,), jnp.float32,
                                minval=0.5, maxval=1.5)

    ref = _reference(x0, linear_w, linear_b, feature_mask,
                     bn_gamma, bn_beta, bn_mean, bn_var)

    # 1) f32 validation mode: proves the shift/BN-fold algebra exactly.
    fwd_f32 = jax.jit(functools.partial(shift_gcn_forward,
                                        compute_dtype=jnp.float32))
    out32 = jax.block_until_ready(
        fwd_f32(x0, linear_w, linear_b, feature_mask,
                bn_gamma, bn_beta, bn_mean, bn_var))
    assert out32.shape == (N, C_out, T, V), out32.shape
    err32 = float(jnp.max(jnp.abs(out32 - ref)))
    assert jnp.allclose(out32, ref, atol=2e-4, rtol=2e-4), err32

    # 2) perf path (default): bf16 MXU inputs / bf16 writeback, f32 accumulate.
    fwd_bf16 = jax.jit(shift_gcn_forward)
    out16 = jax.block_until_ready(
        fwd_bf16(x0, linear_w, linear_b, feature_mask,
                 bn_gamma, bn_beta, bn_mean, bn_var))
    assert out16.shape == (N, C_out, T, V), out16.shape
    err16 = float(jnp.max(jnp.abs(out16 - ref)))
    assert jnp.allclose(out16, ref, atol=6e-2, rtol=5e-2), err16

    print("KERNEL_OK")
</pallas_src>

<mosaic_0001>
module attributes {stable_mosaic.version = 11 : i64} {
  func.func @_shift_gcn_kernel(%arg0: i32, %arg1: memref<400x8xf32, #tpu.memory_space<vmem>>, %arg2: memref<200x8xf32, #tpu.memory_space<vmem>>, %arg3: memref<8x128xf32, #tpu.memory_space<vmem>>, %arg4: memref<200x128xf32, #tpu.memory_space<vmem>>, %arg5: memref<200x128xf32, #tpu.memory_space<vmem>>, %arg6: memref<400x128xf32, #tpu.memory_space<vmem>>) attributes {dimension_semantics = [#tpu.dimension_semantics<parallel>], iteration_bounds = array<i64: 2>, scalar_prefetch = 0 : i64, scratch_operands = 0 : i64, tpu.core_type = #tpu.core_type<tc>, window_params = [{transform_indices = @transform_0, window_bounds = array<i64: 400, 8>}, {pipeline_mode = #tpu.pipeline_mode<synchronous>, transform_indices = @transform_1, window_bounds = array<i64: 200, 8>}, {pipeline_mode = #tpu.pipeline_mode<synchronous>, transform_indices = @transform_2, window_bounds = array<i64: 8, 128>}, {pipeline_mode = #tpu.pipeline_mode<synchronous>, transform_indices = @transform_3, window_bounds = array<i64: 200, 128>}, {pipeline_mode = #tpu.pipeline_mode<synchronous>, transform_indices = @transform_4, window_bounds = array<i64: 200, 128>}, {transform_indices = @transform_5, window_bounds = array<i64: 400, 128>}]} {
    %c0 = arith.constant 0 : index
    %c0_0 = arith.constant 0 : index
    %0 = vector.load %arg1[%c0, %c0_0] : memref<400x8xf32, #tpu.memory_space<vmem>>, vector<400x8xf32>
    %1 = vector.shape_cast %0 : vector<400x8xf32> to vector<2x200x8xf32>
    %c0_1 = arith.constant 0 : index
    %c0_2 = arith.constant 0 : index
    %2 = vector.load %arg2[%c0_1, %c0_2] : memref<200x8xf32, #tpu.memory_space<vmem>>, vector<200x8xf32>
    %3 = vector.shape_cast %2 : vector<200x8xf32> to vector<1x200x8xf32>
    %4 = vector.broadcast %3 : vector<1x200x8xf32> to vector<2x200x8xf32>
    %5 = arith.mulf %1, %4 : vector<2x200x8xf32>
    %6 = vector.shape_cast %5 : vector<2x200x8xf32> to vector<400x8xf32>
    %c0_3 = arith.constant 0 : index
    %c0_4 = arith.constant 0 : index
    %7 = vector.load %arg3[%c0_3, %c0_4] : memref<8x128xf32, #tpu.memory_space<vmem>>, vector<8x128xf32>
    %cst = arith.constant dense<0.000000e+00> : vector<400x128xf32>
    %8 = tpu.matmul %6, %7, %cst {dimension_numbers = #tpu.dot_dimension_numbers<[1], [0], [0], [1], [0, 0, 1, 1], [], []>} : vector<400x8xf32>, vector<8x128xf32>, vector<400x128xf32> -> vector<400x128xf32>
    %9 = vector.shape_cast %8 : vector<400x128xf32> to vector<2x200x128xf32>
    %c0_5 = arith.constant 0 : index
    %c0_6 = arith.constant 0 : index
    %10 = vector.load %arg4[%c0_5, %c0_6] : memref<200x128xf32, #tpu.memory_space<vmem>>, vector<200x128xf32>
    %11 = vector.shape_cast %10 : vector<200x128xf32> to vector<1x200x128xf32>
    %12 = vector.broadcast %11 : vector<1x200x128xf32> to vector<2x200x128xf32>
    %13 = arith.mulf %9, %12 : vector<2x200x128xf32>
    %c0_7 = arith.constant 0 : index
    %c0_8 = arith.constant 0 : index
    %14 = vector.load %arg5[%c0_7, %c0_8] : memref<200x128xf32, #tpu.memory_space<vmem>>, vector<200x128xf32>
    %15 = vector.shape_cast %14 : vector<200x128xf32> to vector<1x200x128xf32>
    %16 = vector.broadcast %15 : vector<1x200x128xf32> to vector<2x200x128xf32>
    %17 = arith.addf %13, %16 : vector<2x200x128xf32>
    %18 = vector.shape_cast %17 : vector<2x200x128xf32> to vector<400x128xf32>
    %c0_9 = arith.constant 0 : index
    %c0_10 = arith.constant 0 : index
    %19 = vector.load %arg6[%c0_9, %c0_10] : memref<400x128xf32, #tpu.memory_space<vmem>>, vector<400x128xf32>
    tpu.vector_store %arg6[%c0_9, %c0_10], %18 {strides = array<i32>} : memref<400x128xf32, #tpu.memory_space<vmem>>, vector<400x128xf32>,
    return
  }
  func.func @transform_0(%arg0: i32) -> (i32, i32) {
    %c0_i32 = arith.constant 0 : i32
    %c0_i32_0 = arith.constant 0 : i32
    return %arg0, %c0_i32 : i32, i32
  }
  func.func @transform_1(%arg0: i32) -> (i32, i32) {
    %c0_i32 = arith.constant 0 : i32
    %c0_i32_0 = arith.constant 0 : i32
    %c0_i32_1 = arith.constant 0 : i32
    return %c0_i32, %c0_i32_0 : i32, i32
  }
  func.func @transform_2(%arg0: i32) -> (i32, i32) {
    %c0_i32 = arith.constant 0 : i32
    %c0_i32_0 = arith.constant 0 : i32
    %c0_i32_1 = arith.constant 0 : i32
    return %c0_i32, %c0_i32_0 : i32, i32
  }
  func.func @transform_3(%arg0: i32) -> (i32, i32) {
    %c0_i32 = arith.constant 0 : i32
    %c0_i32_0 = arith.constant 0 : i32
    %c0_i32_1 = arith.constant 0 : i32
    return %c0_i32, %c0_i32_0 : i32, i32
  }
  func.func @transform_4(%arg0: i32) -> (i32, i32) {
    %c0_i32 = arith.constant 0 : i32
    %c0_i32_0 = arith.constant 0 : i32
    %c0_i32_1 = arith.constant 0 : i32
    return %c0_i32, %c0_i32_0 : i32, i32
  }
  func.func @transform_5(%arg0: i32) -> (i32, i32) {
    %c0_i32 = arith.constant 0 : i32
    %c0_i32_0 = arith.constant 0 : i32
    return %arg0, %c0_i32 : i32, i32
  }
}

</mosaic_0001>

<llo_original>
// kernel: tile.24
$region0: #{tile.24}
  %s0 = inlined_call_operand.vmem [shape: f32[8,25,128], index: 0, kind: input, shape index: {}]
  %s1 = inlined_call_operand.vmem [shape: f32[200,128], index: 1, kind: output, shape index: {}]
  %v2 = vld [vmem:[%s0] sm:$0xff]
  %3 = vst [vmem:[%s1] sm:$0xff] %v2
  %s4 = scalar_lea.vmem %s0, 8
  %v5 = vld [vmem:[%s4] sm:$0xff]
  %s6 = scalar_lea.vmem %s1, 8
  %7 = vst [vmem:[%s6] sm:$0xff] %v5
  %s8 = scalar_lea.vmem %s0, 16
  %v9 = vld [vmem:[%s8] sm:$0xff]
  %s10 = scalar_lea.vmem %s1, 16
  %11 = vst [vmem:[%s10] sm:$0xff] %v9
  %s12 = scalar_lea.vmem %s0, 24
  %s13 = smov 3
  %v14 = vld [vmem:[%s12] ss:$8 sm:%s13]
  %s15 = scalar_lea.vmem %s1, 24
  %16 = vst [vmem:[%s15] sm:$0x3] %v14
  %s17 = scalar_lea.vmem %s0, 33
  %v18 = vld [vmem:[%s17] sm:$0xff]
  %s19 = scalar_lea.vmem %s1, 26
  %20 = vst [vmem:[%s19] sm:$0xff] %v18
  %s21 = scalar_lea.vmem %s0, 41
  %v22 = vld [vmem:[%s21] sm:$0xff]
  %s23 = scalar_lea.vmem %s1, 34
  %24 = vst [vmem:[%s23] sm:$0xff] %v22
  %s25 = scalar_lea.vmem %s0, 49
  %v26 = vld [vmem:[%s25] sm:$0xff]
  %s27 = scalar_lea.vmem %s1, 42
  %28 = vst [vmem:[%s27] sm:$0xff] %v26
  %s29 = scalar_lea.vmem %s0, 64
  %v30 = vld [vmem:[%s29] sm:$0xff]
  %s31 = scalar_lea.vmem %s1, 50
  %32 = vst [vmem:[%s31] sm:$0xff] %v30
  %s33 = scalar_lea.vmem %s0, 72
  %v34 = vld [vmem:[%s33] sm:$0xff]
  %s35 = scalar_lea.vmem %s1, 58
  %36 = vst [vmem:[%s35] sm:$0xff] %v34
  %s37 = scalar_lea.vmem %s0, 80
  %v38 = vld [vmem:[%s37] sm:$0xff]
  %s39 = scalar_lea.vmem %s1, 66
  %40 = vst [vmem:[%s39] sm:$0xff] %v38
  %s41 = scalar_lea.vmem %s0, 88
  %s42 = smov 3
  %v43 = vld [vmem:[%s41] ss:$8 sm:%s42]
  %s44 = scalar_lea.vmem %s1, 74
  %45 = vst [vmem:[%s44] sm:$0x3] %v43
  %s46 = scalar_lea.vmem %s0, 97
  %v47 = vld [vmem:[%s46] sm:$0xff]
  %s48 = scalar_lea.vmem %s1, 76
  %49 = vst [vmem:[%s48] sm:$0xff] %v47
  %s50 = scalar_lea.vmem %s0, 105
  %v51 = vld [vmem:[%s50] sm:$0xff]
  %s52 = scalar_lea.vmem %s1, 84
  %53 = vst [vmem:[%s52] sm:$0xff] %v51
  %s54 = scalar_lea.vmem %s0, 113
  %v55 = vld [vmem:[%s54] sm:$0xff]
  %s56 = scalar_lea.vmem %s1, 92
  %57 = vst [vmem:[%s56] sm:$0xff] %v55
  %s58 = scalar_lea.vmem %s0, 128
  %v59 = vld [vmem:[%s58] sm:$0xff]
  %s60 = scalar_lea.vmem %s1, 100
  %61 = vst [vmem:[%s60] sm:$0xff] %v59
  %s62 = scalar_lea.vmem %s0, 136
  %v63 = vld [vmem:[%s62] sm:$0xff]
  %s64 = scalar_lea.vmem %s1, 108
  %65 = vst [vmem:[%s64] sm:$0xff] %v63
  %s66 = scalar_lea.vmem %s0, 144
  %v67 = vld [vmem:[%s66] sm:$0xff]
  %s68 = scalar_lea.vmem %s1, 116
  %69 = vst [vmem:[%s68] sm:$0xff] %v67
  %s70 = scalar_lea.vmem %s0, 152
  %s71 = smov 3
  %v72 = vld [vmem:[%s70] ss:$8 sm:%s71]
  %s73 = scalar_lea.vmem %s1, 124
  %74 = vst [vmem:[%s73] sm:$0x3] %v72
  %s75 = scalar_lea.vmem %s0, 161
  %v76 = vld [vmem:[%s75] sm:$0xff]
  %s77 = scalar_lea.vmem %s1, 126
  %78 = vst [vmem:[%s77] sm:$0xff] %v76
  %s79 = scalar_lea.vmem %s0, 169
  %v80 = vld [vmem:[%s79] sm:$0xff]
  %s81 = scalar_lea.vmem %s1, 134
  %82 = vst [vmem:[%s81] sm:$0xff] %v80
  %s83 = scalar_lea.vmem %s0, 177
  %v84 = vld [vmem:[%s83] sm:$0xff]
  %s85 = scalar_lea.vmem %s1, 142
  %86 = vst [vmem:[%s85] sm:$0xff] %v84
  %s87 = scalar_lea.vmem %s0, 192
  %v88 = vld [vmem:[%s87] sm:$0xff]
  %s89 = scalar_lea.vmem %s1, 150
  %90 = vst [vmem:[%s89] sm:$0xff] %v88
  %s91 = scalar_lea.vmem %s0, 200
  %v92 = vld [vmem:[%s91] sm:$0xff]
  %s93 = scalar_lea.vmem %s1, 158
  %94 = vst [vmem:[%s93] sm:$0xff] %v92
  %s95 = scalar_lea.vmem %s0, 208
  %v96 = vld [vmem:[%s95] sm:$0xff]
  %s97 = scalar_lea.vmem %s1, 166
  %98 = vst [vmem:[%s97] sm:$0xff] %v96
  %s99 = scalar_lea.vmem %s0, 216
  %s100 = smov 3
  %v101 = vld [vmem:[%s99] ss:$8 sm:%s100]
  %s102 = scalar_lea.vmem %s1, 174
  %103 = vst [vmem:[%s102] sm:$0x3] %v101
  %s104 = scalar_lea.vmem %s0, 225
  %v105 = vld [vmem:[%s104] sm:$0xff]
  %s106 = scalar_lea.vmem %s1, 176
  %107 = vst [vmem:[%s106] sm:$0xff] %v105
  %s108 = scalar_lea.vmem %s0, 233
  %v109 = vld [vmem:[%s108] sm:$0xff]
  %s110 = scalar_lea.vmem %s1, 184
  %111 = vst [vmem:[%s110] sm:$0xff] %v109
  %s112 = scalar_lea.vmem %s0, 241
  %v113 = vld [vmem:[%s112] sm:$0xff]
  %s114 = scalar_lea.vmem %s1, 192
  %115 = vst [vmem:[%s114] sm:$0xff] %v113

// kernel: tile.19
$region0: #{tile.19}
  %s0 = inlined_call_operand.vmem [shape: f32[8,25,8], index: 0, kind: input, shape index: {}]
  %s1 = inlined_call_operand.vmem [shape: f32[200,8], index: 1, kind: output, shape index: {}]
  %v2 = vld [vmem:[%s0] ss:$8 sm:$0xf]
  %v3 = vld [vmem:[%s0] ss:$8 sm:$0xf0]
  %vm4 = vcmask 1047556
  %v5 = vsel %vm4, %v3, %v2
  %vm6 = vcmask 203776
  %7 = vst.msk [vmem:[%s1] sm:$0xff] %vm6, %v5
  %s8 = scalar_lea.vmem %s0, 5
  %v9 = vld [vmem:[%s8] ss:$8 sm:$0xf]
  %s10 = scalar_lea.vmem %s0, 5
  %v11 = vld [vmem:[%s10] ss:$8 sm:$0xf0]
  %vm12 = vcmask 1047556
  %v13 = vsel %vm12, %v11, %v9
  %s14 = scalar_lea.vmem %s0, 5
  %v15 = vld [vmem:[%s14] ss:$8 sm:$0xf]
  %s16 = scalar_lea.vmem %s0, 5
  %v17 = vld [vmem:[%s16] ss:$8 sm:$0xf0]
  %vm18 = vcmask 1047556
  %v19 = vsel %vm18, %v17, %v15
  %vm20 = vcmask 23552
  %v21 = vsel %vm20, %v19, %v13
  %22 = vrot.lane.b32.xlu0 %v21, 125
  %v23 = vpop.permute.xlu0 %22
  %vm24 = vcmask 179200
  %s25 = scalar_lea.vmem %s1, 8
  %26 = vst.msk [vmem:[%s25] sm:$0xff] %vm24, %v23
  %vm27 = vcmask 1048552
  %28 = vst.msk [vmem:[%s1] sm:$0xff] %vm27, %v23
  %s29 = scalar_lea.vmem %s0, 4
  %v30 = vld [vmem:[%s29] ss:$8 sm:$0xf]
  %s31 = scalar_lea.vmem %s0, 4
  %v32 = vld [vmem:[%s31] ss:$8 sm:$0xf0]
  %vm33 = vcmask 1047556
  %v34 = vsel %vm33, %v32, %v30
  %35 = vrot.lane.b32.xlu0 %v34, 100
  %v36 = vpop.permute.xlu0 %35
  %vm37 = vcmask 1023776
  %38 = vst.msk [vmem:[%s1] sm:$0xff] %vm37, %v36
  %s39 = scalar_lea.vmem %s0, 3
  %v40 = vld [vmem:[%s39] ss:$8 sm:$0xf]
  %s41 = scalar_lea.vmem %s0, 3
  %v42 = vld [vmem:[%s41] ss:$8 sm:$0xf0]
  %vm43 = vcmask 1047556
  %v44 = vsel %vm43, %v42, %v40
  %45 = vrot.lane.b32.xlu0 %v44, 75
  %v46 = vpop.permute.xlu0 %45
  %vm47 = vcmask 818776
  %48 = vst.msk [vmem:[%s1] sm:$0xff] %vm47, %v46
  %s49 = scalar_lea.vmem %s0, 2
  %v50 = vld [vmem:[%s49] ss:$8 sm:$0xf]
  %s51 = scalar_lea.vmem %s0, 2
  %v52 = vld [vmem:[%s51] ss:$8 sm:$0xf0]
  %vm53 = vcmask 1047556
  %v54 = vsel %vm53, %v52, %v50
  %55 = vrot.lane.b32.xlu0 %v54, 50
  %v56 = vpop.permute.xlu0 %55
  %vm57 = vcmask 613776
  %58 = vst.msk [vmem:[%s1] sm:$0xff] %vm57, %v56
  %s59 = scalar_lea.vmem %s0, 7
  %v60 = vld [vmem:[%s59] ss:$8 sm:$0xf]
  %s61 = scalar_lea.vmem %s0, 7
  %v62 = vld [vmem:[%s61] ss:$8 sm:$0xf0]
  %vm63 = vcmask 1047556
  %v64 = vsel %vm63, %v62, %v60
  %65 = vrot.lane.b32.xlu0 %v64, 47
  %v66 = vpop.permute.xlu0 %65
  %vm67 = vcmask 589176
  %s68 = scalar_lea.vmem %s1, 8
  %69 = vst.msk [vmem:[%s68] sm:$0xff] %vm67, %v66
  %s70 = scalar_lea.vmem %s0, 1
  %v71 = vld [vmem:[%s70] ss:$8 sm:$0xf]
  %s72 = scalar_lea.vmem %s0, 1
  %v73 = vld [vmem:[%s72] ss:$8 sm:$0xf0]
  %vm74 = vcmask 1047556
  %v75 = vsel %vm74, %v73, %v71
  %76 = vrot.lane.b32.xlu0 %v75, 25
  %v77 = vpop.permute.xlu0 %76
  %vm78 = vcmask 408776
  %79 = vst.msk [vmem:[%s1] sm:$0xff] %vm78, %v77
  %s80 = scalar_lea.vmem %s0, 6
  %v81 = vld [vmem:[%s80] ss:$8 sm:$0xf]
  %s82 = scalar_lea.vmem %s0, 6
  %v83 = vld [vmem:[%s82] ss:$8 sm:$0xf0]
  %vm84 = vcmask 1047556
  %v85 = vsel %vm84, %v83, %v81
  %86 = vrot.lane.b32.xlu0 %v85, 22
  %v87 = vpop.permute.xlu0 %86
  %vm88 = vcmask 384176
  %s89 = scalar_lea.vmem %s1, 8
  %90 = vst.msk [vmem:[%s89] sm:$0xff] %vm88, %v87

</llo_original>
